<compile_context>
chip_gen: v6e
topology: v6e:2x2x1
jax: 0.10.0
libtpu: 0.0.40
codegen_flags: <defaults>
</compile_context>

<pallas_src>
import numpy as np

import jax
import jax.numpy as jnp
from jax.experimental import pallas as pl
from jax.experimental.pallas import tpu as pltpu


def _softmax_group_aux(m_lanes: int, group: int) -> np.ndarray:
    """Constant [L, M, M] matrix stack for an exact per-group softmax on a
    g-major [1, M] lane row (M = n_groups * group; groups are contiguous,
    aligned chunks of `group` lanes).

      aux[0..t-1] : clamped suffix-shift permutations (Hillis-Steele doubling)
                    -> per-lane suffix max within its group.
      aux[t]      : broadcast matrix (lane j <- its group's first lane)
                    -> turns the suffix max into the full per-group max.
      aux[t+1]    : block-of-ones matrix (lane j <- sum over its group)
                    -> per-group softmax denominator.
    Works for any group size (power of two not required).
    """
    idx = np.arange(m_lanes)
    blk = idx // group
    mats = []
    k = 1
    while k < group:
        partner = np.where((idx % group) + k < group, idx + k, idx)
        mats.append((idx[:, None] == partner[None, :]).astype(np.float32))
        k *= 2
    start = blk * group
    mats.append((idx[:, None] == start[None, :]).astype(np.float32))   # group-max broadcast
    mats.append((blk[:, None] == blk[None, :]).astype(np.float32))     # group sums
    return np.stack(mats)


def task_attention_kernel(x_ref, w1_ref, b1_ref, w2_ref, aux_ref, out_ref):
    # x:   [M, D]   (M = Gb*B, rows ordered g-major: r = g_local*B + b)
    # w1:  [D, H]   b1: [1, H]   w2: [1, H]   aux: [L, M, M]   out: [1, M]
    x = x_ref[...]

    # fc1 + ReLU: one MXU pass (M = Gb*B rows), bias/relu on the VPU.
    h = jnp.dot(x, w1_ref[...], preferred_element_type=jnp.float32) + b1_ref[...]
    h = jnp.maximum(h, 0.0)                                            # [M, H]

    # fc2 as  w2_row @ h^T  -> logits land lane-dense as [1, M] (no relayout).
    # b2 is intentionally omitted: a uniform shift cancels in the softmax.
    logits = jax.lax.dot_general(
        w2_ref[...], h,
        dimension_numbers=(((1,), (1,)), ((), ())),
        preferred_element_type=jnp.float32)                            # [1, M]

    n_shift = aux_ref.shape[0] - 2

    # Exact per-group (per meta-batch) max via clamped suffix-shift doubling,
    # then broadcast to every lane of the group.  Uses tiny constant matmuls
    # instead of a lane<->sublane reshape.
    m = logits
    for s in range(n_shift):
        m = jnp.maximum(
            m, jnp.dot(m, aux_ref[s], preferred_element_type=jnp.float32))
    gmax = jnp.dot(m, aux_ref[n_shift], preferred_element_type=jnp.float32)

    # Numerically stable, exact per-group softmax (exact division -> rows sum to 1).
    e = jnp.exp(logits - gmax)                                         # [1, M]
    gsum = jnp.dot(e, aux_ref[n_shift + 1], preferred_element_type=jnp.float32)
    out_ref[...] = e / gsum                                            # [1, M]


def task_attention_batched(x_gbd, w1, b1, w2_row, b2=None, *, lanes_per_step=128):
    """G independent meta-batches: [G, B, D] f32 -> per-group softmax weights [G, B].

    lanes_per_step: target Gb*B per grid step (128 matches the v5e MXU; use 256
    on v6e/v7x).  Weights and softmax helper matrices use constant index_maps
    so they are DMA'd once and stay VMEM-resident across the grid.
    """
    del b2  # uniform logit shift; cancels in the softmax
    G, B, D = x_gbd.shape
    H = w1.shape[1]

    gb = max(lanes_per_step // B, 1)
    gb = min(gb, G)                       # don't zero-pad tiny problems up to 128 lanes
    g_steps = pl.cdiv(G, gb)
    g_pad = g_steps * gb
    m_lanes = gb * B

    x = x_gbd.astype(jnp.float32)
    if g_pad != G:
        x = jnp.concatenate([x, jnp.zeros((g_pad - G, B, D), jnp.float32)], axis=0)
    # g-major flatten per grid step (free reshape; B rows == one sublane tile).
    x_steps = x.reshape(g_steps, m_lanes, D)

    aux = jnp.asarray(_softmax_group_aux(m_lanes, B))
    L = aux.shape[0]

    flops = g_steps * (2 * m_lanes * D * H + 2 * m_lanes * H
                       + 2 * L * m_lanes * m_lanes + 8 * m_lanes)
    transcendentals = g_steps * m_lanes
    bytes_accessed = 4 * (g_steps * m_lanes * D + D * H + 2 * H
                          + L * m_lanes * m_lanes + g_steps * m_lanes)

    out = pl.pallas_call(
        task_attention_kernel,
        out_shape=jax.ShapeDtypeStruct((g_steps, 1, m_lanes), jnp.float32),
        grid=(g_steps,),
        in_specs=[
            # per-step activation slab (leading step dim squeezed away)
            pl.BlockSpec((None, m_lanes, D), lambda i: (i, 0, 0)),
            # weights: constant index_map -> DMA'd once, VMEM-resident
            pl.BlockSpec((D, H), lambda i: (0, 0)),
            pl.BlockSpec((1, H), lambda i: (0, 0)),
            pl.BlockSpec((1, H), lambda i: (0, 0)),
            # softmax helper matrices: also VMEM-resident
            pl.BlockSpec((L, m_lanes, m_lanes), lambda i: (0, 0, 0)),
        ],
        out_specs=pl.BlockSpec((None, 1, m_lanes), lambda i: (i, 0, 0)),
        compiler_params=pltpu.CompilerParams(
            dimension_semantics=("parallel",)),
        cost_estimate=pl.CostEstimate(
            flops=flops,
            transcendentals=transcendentals,
            bytes_accessed=bytes_accessed),
    )(x_steps, w1, b1, w2_row, aux)

    return out.reshape(g_pad, B)[:G]


def task_attention(task_embeddings, w1, b1, w2_row, b2=None):
    """Original module semantics: [B, D] float32 -> task weights [B] float32."""
    return task_attention_batched(task_embeddings[None, ...], w1, b1, w2_row, b2)[0]


def init_params(key, input_dim, hidden=16):
    """Deterministic init mimicking nn.Linear's uniform(-1/sqrt(fan_in), 1/sqrt(fan_in)).

    w1 is stored math-style [D, H]; w2 as a row [1, H] (PyTorch layout of
    nn.Linear(16, 1).weight); b2 is [1, 1] (kept for interface parity only —
    it cancels under the softmax, so the kernel never sees it).
    """
    k1, k2, k3, k4 = jax.random.split(key, 4)
    bound1 = 1.0 / jnp.sqrt(jnp.float32(input_dim))
    bound2 = 1.0 / jnp.sqrt(jnp.float32(hidden))
    w1 = jax.random.uniform(k1, (input_dim, hidden), jnp.float32, -bound1, bound1)
    b1 = jax.random.uniform(k2, (1, hidden), jnp.float32, -bound1, bound1)
    w2_row = jax.random.uniform(k3, (1, hidden), jnp.float32, -bound2, bound2)
    b2 = jax.random.uniform(k4, (1, 1), jnp.float32, -bound2, bound2)
    return w1, b1, w2_row, b2


if __name__ == "__main__":
    key = jax.random.PRNGKey(0)
    k_x, k_p = jax.random.split(key)

    meta_batch_size = 8   # B
    input_dim = 32        # D

    task_embeddings = jax.random.normal(
        k_x, (meta_batch_size, input_dim), jnp.float32)
    w1, b1, w2_row, b2 = init_params(k_p, input_dim)

    # ---- single forward pass (matches the PyTorch module) -------------------
    weights = task_attention(task_embeddings, w1, b1, w2_row, b2)
    jax.block_until_ready(weights)

    assert weights.shape == (meta_batch_size,)
    assert jnp.abs(jnp.sum(weights) - 1.0) < 1e-5   # exact division -> proper distribution

    ref = jax.nn.softmax(
        jnp.maximum(task_embeddings @ w1 + b1, 0.0) @ w2_row.T + b2, axis=0
    )[:, 0]
    assert jnp.allclose(weights, ref, atol=2e-4)

    # ---- batched path: G meta-batches, Gb=16 groups fused per grid step -----
    # G=20 is deliberately not a multiple of Gb to exercise padding; g_steps=2
    # so the "parallel" grid axis can split across v7x's two TensorCores.
    G = 20
    x_g = jax.random.normal(
        jax.random.PRNGKey(1), (G, meta_batch_size, input_dim), jnp.float32)
    w_g = task_attention_batched(x_g, w1, b1, w2_row, b2)
    jax.block_until_ready(w_g)

    ref_g = jax.nn.softmax(
        jnp.maximum(jnp.einsum("gbd,dh->gbh", x_g, w1) + b1, 0.0) @ w2_row.T + b2,
        axis=1,
    )[..., 0]
    assert w_g.shape == (G, meta_batch_size)
    assert jnp.allclose(jnp.sum(w_g, axis=1), 1.0, atol=1e-5)
    assert jnp.allclose(w_g, ref_g, atol=2e-4)

    print("KERNEL_OK")
</pallas_src>

<mosaic_0001>
module attributes {stable_mosaic.version = 11 : i64} {
  func.func @task_attention_kernel(%arg0: i32, %arg1: memref<1x8x32xf32, #tpu.memory_space<vmem>>, %arg2: memref<32x16xf32, #tpu.memory_space<vmem>>, %arg3: memref<1x16xf32, #tpu.memory_space<vmem>>, %arg4: memref<1x16xf32, #tpu.memory_space<vmem>>, %arg5: memref<5x8x8xf32, #tpu.memory_space<vmem>>, %arg6: memref<1x1x8xf32, #tpu.memory_space<vmem>>) attributes {dimension_semantics = [#tpu.dimension_semantics<parallel>], iteration_bounds = array<i64: 1>, scalar_prefetch = 0 : i64, scratch_operands = 0 : i64, tpu.core_type = #tpu.core_type<tc>, window_params = [{transform_indices = @transform_0, window_bounds = array<i64: 1, 8, 32>}, {pipeline_mode = #tpu.pipeline_mode<synchronous>, transform_indices = @transform_1, window_bounds = array<i64: 32, 16>}, {pipeline_mode = #tpu.pipeline_mode<synchronous>, transform_indices = @transform_2, window_bounds = array<i64: 1, 16>}, {pipeline_mode = #tpu.pipeline_mode<synchronous>, transform_indices = @transform_3, window_bounds = array<i64: 1, 16>}, {pipeline_mode = #tpu.pipeline_mode<synchronous>, transform_indices = @transform_4, window_bounds = array<i64: 5, 8, 8>}, {transform_indices = @transform_5, window_bounds = array<i64: 1, 1, 8>}]} {
    %c0 = arith.constant 0 : index
    %c0_0 = arith.constant 0 : index
    %c0_1 = arith.constant 0 : index
    %0 = vector.load %arg1[%c0, %c0_0, %c0_1] : memref<1x8x32xf32, #tpu.memory_space<vmem>>, vector<1x8x32xf32>
    %1 = vector.shape_cast %0 : vector<1x8x32xf32> to vector<8x32xf32>
    %c0_2 = arith.constant 0 : index
    %c0_3 = arith.constant 0 : index
    %2 = vector.load %arg2[%c0_2, %c0_3] : memref<32x16xf32, #tpu.memory_space<vmem>>, vector<32x16xf32>
    %cst = arith.constant dense<0.000000e+00> : vector<8x16xf32>
    %3 = tpu.matmul %1, %2, %cst {dimension_numbers = #tpu.dot_dimension_numbers<[1], [0], [0], [1], [0, 0, 1, 1], [], []>} : vector<8x32xf32>, vector<32x16xf32>, vector<8x16xf32> -> vector<8x16xf32>
    %c0_4 = arith.constant 0 : index
    %c0_5 = arith.constant 0 : index
    %4 = vector.load %arg3[%c0_4, %c0_5] : memref<1x16xf32, #tpu.memory_space<vmem>>, vector<1x16xf32>
    %5 = vector.broadcast %4 : vector<1x16xf32> to vector<8x16xf32>
    %6 = arith.addf %3, %5 : vector<8x16xf32>
    %cst_6 = arith.constant 0.000000e+00 : f32
    %7 = vector.broadcast %cst_6 : f32 to vector<8x16xf32>
    %8 = arith.maximumf %6, %7 : vector<8x16xf32>
    %c0_7 = arith.constant 0 : index
    %c0_8 = arith.constant 0 : index
    %9 = vector.load %arg4[%c0_7, %c0_8] : memref<1x16xf32, #tpu.memory_space<vmem>>, vector<1x16xf32>
    %cst_9 = arith.constant dense<0.000000e+00> : vector<1x8xf32>
    %10 = tpu.matmul %9, %8, %cst_9 {dimension_numbers = #tpu.dot_dimension_numbers<[1], [1], [0], [0], [0, 0, 1, 0], [], []>} : vector<1x16xf32>, vector<8x16xf32>, vector<1x8xf32> -> vector<1x8xf32>
    %c0_10 = arith.constant 0 : index
    %c0_11 = arith.constant 0 : index
    %c0_12 = arith.constant 0 : index
    %11 = vector.load %arg5[%c0_10, %c0_11, %c0_12] : memref<5x8x8xf32, #tpu.memory_space<vmem>>, vector<1x8x8xf32>
    %12 = vector.shape_cast %11 : vector<1x8x8xf32> to vector<8x8xf32>
    %cst_13 = arith.constant dense<0.000000e+00> : vector<1x8xf32>
    %13 = tpu.matmul %10, %12, %cst_13 {dimension_numbers = #tpu.dot_dimension_numbers<[1], [0], [0], [1], [0, 0, 1, 1], [], []>} : vector<1x8xf32>, vector<8x8xf32>, vector<1x8xf32> -> vector<1x8xf32>
    %14 = arith.maximumf %10, %13 : vector<1x8xf32>
    %c1 = arith.constant 1 : index
    %c0_14 = arith.constant 0 : index
    %c0_15 = arith.constant 0 : index
    %15 = vector.load %arg5[%c1, %c0_14, %c0_15] : memref<5x8x8xf32, #tpu.memory_space<vmem>>, vector<1x8x8xf32>
    %16 = vector.shape_cast %15 : vector<1x8x8xf32> to vector<8x8xf32>
    %cst_16 = arith.constant dense<0.000000e+00> : vector<1x8xf32>
    %17 = tpu.matmul %14, %16, %cst_16 {dimension_numbers = #tpu.dot_dimension_numbers<[1], [0], [0], [1], [0, 0, 1, 1], [], []>} : vector<1x8xf32>, vector<8x8xf32>, vector<1x8xf32> -> vector<1x8xf32>
    %18 = arith.maximumf %14, %17 : vector<1x8xf32>
    %c2 = arith.constant 2 : index
    %c0_17 = arith.constant 0 : index
    %c0_18 = arith.constant 0 : index
    %19 = vector.load %arg5[%c2, %c0_17, %c0_18] : memref<5x8x8xf32, #tpu.memory_space<vmem>>, vector<1x8x8xf32>
    %20 = vector.shape_cast %19 : vector<1x8x8xf32> to vector<8x8xf32>
    %cst_19 = arith.constant dense<0.000000e+00> : vector<1x8xf32>
    %21 = tpu.matmul %18, %20, %cst_19 {dimension_numbers = #tpu.dot_dimension_numbers<[1], [0], [0], [1], [0, 0, 1, 1], [], []>} : vector<1x8xf32>, vector<8x8xf32>, vector<1x8xf32> -> vector<1x8xf32>
    %22 = arith.maximumf %18, %21 : vector<1x8xf32>
    %c3 = arith.constant 3 : index
    %c0_20 = arith.constant 0 : index
    %c0_21 = arith.constant 0 : index
    %23 = vector.load %arg5[%c3, %c0_20, %c0_21] : memref<5x8x8xf32, #tpu.memory_space<vmem>>, vector<1x8x8xf32>
    %24 = vector.shape_cast %23 : vector<1x8x8xf32> to vector<8x8xf32>
    %cst_22 = arith.constant dense<0.000000e+00> : vector<1x8xf32>
    %25 = tpu.matmul %22, %24, %cst_22 {dimension_numbers = #tpu.dot_dimension_numbers<[1], [0], [0], [1], [0, 0, 1, 1], [], []>} : vector<1x8xf32>, vector<8x8xf32>, vector<1x8xf32> -> vector<1x8xf32>
    %26 = arith.subf %10, %25 : vector<1x8xf32>
    %27 = math.exp %26 : vector<1x8xf32>
    %c4 = arith.constant 4 : index
    %c0_23 = arith.constant 0 : index
    %c0_24 = arith.constant 0 : index
    %28 = vector.load %arg5[%c4, %c0_23, %c0_24] : memref<5x8x8xf32, #tpu.memory_space<vmem>>, vector<1x8x8xf32>
    %29 = vector.shape_cast %28 : vector<1x8x8xf32> to vector<8x8xf32>
    %cst_25 = arith.constant dense<0.000000e+00> : vector<1x8xf32>
    %30 = tpu.matmul %27, %29, %cst_25 {dimension_numbers = #tpu.dot_dimension_numbers<[1], [0], [0], [1], [0, 0, 1, 1], [], []>} : vector<1x8xf32>, vector<8x8xf32>, vector<1x8xf32> -> vector<1x8xf32>
    %31 = arith.divf %27, %30 : vector<1x8xf32>
    %c0_26 = arith.constant 0 : index
    %c0_27 = arith.constant 0 : index
    %c0_28 = arith.constant 0 : index
    %32 = vector.load %arg6[%c0_26, %c0_27, %c0_28] : memref<1x1x8xf32, #tpu.memory_space<vmem>>, vector<1x1x8xf32>
    %33 = vector.shape_cast %32 : vector<1x1x8xf32> to vector<1x8xf32>
    %34 = vector.shape_cast %31 : vector<1x8xf32> to vector<1x1x8xf32>
    tpu.vector_store %arg6[%c0_26, %c0_27, %c0_28], %34 {strides = array<i32>} : memref<1x1x8xf32, #tpu.memory_space<vmem>>, vector<1x1x8xf32>,
    return
  }
  func.func @transform_0(%arg0: i32) -> (i32, i32, i32) {
    %c0_i32 = arith.constant 0 : i32
    %c0_i32_0 = arith.constant 0 : i32
    %c0_i32_1 = arith.constant 0 : i32
    return %arg0, %c0_i32, %c0_i32_0 : i32, i32, i32
  }
  func.func @transform_1(%arg0: i32) -> (i32, i32) {
    %c0_i32 = arith.constant 0 : i32
    %c0_i32_0 = arith.constant 0 : i32
    %c0_i32_1 = arith.constant 0 : i32
    return %c0_i32, %c0_i32_0 : i32, i32
  }
  func.func @transform_2(%arg0: i32) -> (i32, i32) {
    %c0_i32 = arith.constant 0 : i32
    %c0_i32_0 = arith.constant 0 : i32
    %c0_i32_1 = arith.constant 0 : i32
    return %c0_i32, %c0_i32_0 : i32, i32
  }
  func.func @transform_3(%arg0: i32) -> (i32, i32) {
    %c0_i32 = arith.constant 0 : i32
    %c0_i32_0 = arith.constant 0 : i32
    %c0_i32_1 = arith.constant 0 : i32
    return %c0_i32, %c0_i32_0 : i32, i32
  }
  func.func @transform_4(%arg0: i32) -> (i32, i32, i32) {
    %c0_i32 = arith.constant 0 : i32
    %c0_i32_0 = arith.constant 0 : i32
    %c0_i32_1 = arith.constant 0 : i32
    %c0_i32_2 = arith.constant 0 : i32
    return %c0_i32, %c0_i32_0, %c0_i32_1 : i32, i32, i32
  }
  func.func @transform_5(%arg0: i32) -> (i32, i32, i32) {
    %c0_i32 = arith.constant 0 : i32
    %c0_i32_0 = arith.constant 0 : i32
    %c0_i32_1 = arith.constant 0 : i32
    return %arg0, %c0_i32, %c0_i32_0 : i32, i32, i32
  }
}

</mosaic_0001>

<llo_original>
// kernel: tpu_custom_call.1
$region0: #{tpu_custom_call.1}
  #allocation0 [shape = 'u32[]', space=smem, size = 0x4, offset = 0x4, fixed_abs, tag = 'smem constant byte address 0x4 - core index']
  #allocation1 [shape = 'u32[144,128]{1,0:T(1,128)}', space=vmem, size = 0x12000, scoped, tag = 'internal scratch']
  %s0 = inlined_call_operand.vmem [shape: f32[1,8,32], index: 0, kind: input, shape index: {}]
  %s1 = inlined_call_operand.vmem [shape: f32[32,16], index: 1, kind: input, shape index: {}]
  %s2 = inlined_call_operand.vmem [shape: f32[1,16], index: 2, kind: input, shape index: {}]
  %s3 = inlined_call_operand.vmem [shape: f32[1,16], index: 3, kind: input, shape index: {}]
  %s4 = inlined_call_operand.vmem [shape: f32[5,8,8], index: 4, kind: input, shape index: {}]
  %s5 = inlined_call_operand.hbm [shape: f32[1,1,8], index: 5, kind: output, shape index: {}]
  %s6 = sld [smem:[#allocation0]]
  $region30: #{tpu_custom_call.1} parent=0
    _
  %s8 = ssub.s32 1, %s6
  %s9 = scalar_select 0, %s8, %s6
  $region1: #{tpu_custom_call.1} parent=0
    #allocation2 [shape = 'u8[512]{0}', space=vmem, size = 0x400, scoped, tag = 'output window, operand 0, single buffered']
    #allocation3 [shape = 's32[1]{0}', space=sflag, size = 0x4, scoped, tag = 'scoped memory for tpu_custom_call.1']
    %10 = vsyncpa [#allocation3], 0
    // Predicated region
    $region2: #{tpu_custom_call.1} parent=1 // pred_check
      _
    $region3: #{tpu_custom_call.1} parent=1 // pred_check_branch
      %12 = sbr.rel (0) target = $region5
    $region4: #{tpu_custom_call.1} parent=1 // pred_region
      _
    $region5: #{tpu_custom_call.1} parent=1 // pred_fallthru
      _
    // Predicated region
    $region6: #{tpu_custom_call.1} parent=1 // pred_check
      _
    $region7: #{tpu_custom_call.1} parent=1 // pred_check_branch
      %14 = sbr.rel (0) target = $region9
    $region8: #{tpu_custom_call.1} parent=1 // pred_region
      _
    $region9: #{tpu_custom_call.1} parent=1 // pred_fallthru
      _
    // Predicated region
    $region10: #{tpu_custom_call.1} parent=1 // pred_check
      _
    $region11: #{tpu_custom_call.1} parent=1 // pred_check_branch
      %16 = sbr.rel (0) target = $region13
    $region12: #{tpu_custom_call.1} parent=1 // pred_region
      _
    $region13: #{tpu_custom_call.1} parent=1 // pred_fallthru
      _
    // Predicated region
    $region14: #{tpu_custom_call.1} parent=1 // pred_check
      _
    $region15: #{tpu_custom_call.1} parent=1 // pred_check_branch
      %18 = sbr.rel (0) target = $region17
    $region16: #{tpu_custom_call.1} parent=1 // pred_region
      _
    $region17: #{tpu_custom_call.1} parent=1 // pred_fallthru
      _
    // Predicated region
    $region18: #{tpu_custom_call.1} parent=1 // pred_check
      _
    $region19: #{tpu_custom_call.1} parent=1 // pred_check_branch
      %20 = sbr.rel (0) target = $region21
    $region20: #{tpu_custom_call.1} parent=1 // pred_region
      _
    $region21: #{tpu_custom_call.1} parent=1 // pred_fallthru
      _
    %v21 = vld [vmem:[%s0] sm:$0xff]
    %v22 = vld [vmem:[%s1] sm:$0xff]
    %v23 = vld [vmem:[%s1 + $0x8] sm:$0xff]
    %v24 = vld [vmem:[%s1 + $0x10] sm:$0xff]
    %v25 = vld [vmem:[%s1 + $0x18] sm:$0xff]
    %v26 = vld [vmem:[%s2] sm:$0x1]
    %v28 = vlaneseq
    %v29 = vshrl.u32 %v28, 7
    %v30 = vsub.s32 0, %v29
    %v31 = vrot.slane %v26, %v30
    %vm33 = vcmask 261120
    %v35 = vsel %vm33, %v21, 0
    %37 = vmatprep.subr.mxu0 0.0
    %38 = vmatpush1.msra.mxu0 0.0
    %39 = vmatprep.subr.mxu0 0.0
    %40 = vmatpush1.msra.mxu0 0.0
    %41 = vmatprep.subr.mxu0 0.0
    %42 = vmatpush1.msra.mxu0 0.0
    %43 = vmatprep.subr.mxu0 0.0
    %44 = vmatpush1.msra.mxu0 0.0
    %45 = vmatprep.subr.mxu0 0.0
    %46 = vmatpush1.msra.mxu0 0.0
    %47 = vmatprep.subr.mxu0 0.0
    %48 = vmatpush1.msra.mxu0 0.0
    %49 = vmatprep.subr.mxu0 0.0
    %50 = vmatpush1.msra.mxu0 0.0
    %51 = vmatprep.subr.mxu0 0.0
    %52 = vmatpush1.msra.mxu0 0.0
    %53 = vmatprep.subr.mxu0 0.0
    %54 = vmatpush1.msra.mxu0 0.0
    %55 = vmatprep.subr.mxu0 0.0
    %56 = vmatpush1.msra.mxu0 0.0
    %57 = vmatprep.subr.mxu0 0.0
    %58 = vmatpush1.msra.mxu0 0.0
    %59 = vmatprep.subr.mxu0 0.0
    %60 = vmatpush1.msra.mxu0 0.0
    %61 = vmatprep.subr.mxu0 0.0
    %62 = vmatpush1.msra.mxu0 %v25
    %63 = vmatprep.subr.mxu0 0.0
    %64 = vmatpush1.msra.mxu0 %v24
    %65 = vmatprep.subr.mxu0 0.0
    %66 = vmatpush1.msra.mxu0 %v23
    %67 = vmatprep.subr.mxu0 0.0
    %68 = vmatpush1.msra.mxu0 %v22
    %69 = vmatprep.subr.mxu0 0.0
    %70 = vmatpush2.msra.mxu0 0.0
    %71 = vmatprep.subr.mxu0 0.0
    %72 = vmatpush2.msra.mxu0 0.0
    %73 = vmatprep.subr.mxu0 0.0
    %74 = vmatpush2.msra.mxu0 0.0
    %75 = vmatprep.subr.mxu0 0.0
    %76 = vmatpush2.msra.mxu0 0.0
    %77 = vmatprep.subr.mxu0 0.0
    %78 = vmatpush2.msra.mxu0 0.0
    %79 = vmatprep.subr.mxu0 0.0
    %80 = vmatpush2.msra.mxu0 0.0
    %81 = vmatprep.subr.mxu0 0.0
    %82 = vmatpush2.msra.mxu0 0.0
    %83 = vmatprep.subr.mxu0 0.0
    %84 = vmatpush2.msra.mxu0 0.0
    %85 = vmatprep.subr.mxu0 0.0
    %86 = vmatpush2.msra.mxu0 0.0
    %87 = vmatprep.subr.mxu0 0.0
    %88 = vmatpush2.msra.mxu0 0.0
    %89 = vmatprep.subr.mxu0 0.0
    %90 = vmatpush2.msra.mxu0 0.0
    %91 = vmatprep.subr.mxu0 0.0
    %92 = vmatpush2.msra.mxu0 0.0
    %93 = vmatprep.subr.mxu0 0.0
    %94 = vmatpush2.msra.mxu0 0.0
    %95 = vmatprep.subr.mxu0 0.0
    %96 = vmatpush2.msra.mxu0 0.0
    %97 = vmatprep.subr.mxu0 0.0
    %98 = vmatpush2.msra.mxu0 0.0
    %99 = vmatprep.subr.mxu0 0.0
    %100 = vmatpush2.msra.mxu0 0.0
    %101 = vmatprep.mubr.f32.mxu0 0.0
    %102 = vmatmul.mubr.f32.gmra.mxu0 %v35
    %v103 = vpop.f32.mrf.mxu0
    %v104 = vadd.f32 %v31, %v103
    %v105 = vpop.f32.mrf.mxu0
    %106 = vdwg.mxu0
    %v107 = vmax.f32 %v104, 0.0
    %v108 = vld [vmem:[%s3] sm:$0x1]
    %vm109 = vcmask 130048
    %v111 = vsel %vm109, %v108, 0
    %v114 = vsel %vm109, %v107, 0
    %116 = vmatprep.subr.mxu0 0.0
    %117 = vmatpush1.xpose.msra.mxu0 0.0
    %118 = vmatprep.subr.mxu0 0.0
    %119 = vmatpush1.xpose.msra.mxu0 0.0
    %120 = vmatprep.subr.mxu0 0.0
    %121 = vmatpush1.xpose.msra.mxu0 0.0
    %122 = vmatprep.subr.mxu0 0.0
    %123 = vmatpush1.xpose.msra.mxu0 0.0
    %124 = vmatprep.subr.mxu0 0.0
    %125 = vmatpush1.xpose.msra.mxu0 0.0
    %126 = vmatprep.subr.mxu0 0.0
    %127 = vmatpush1.xpose.msra.mxu0 0.0
    %128 = vmatprep.subr.mxu0 0.0
    %129 = vmatpush1.xpose.msra.mxu0 0.0
    %130 = vmatprep.subr.mxu0 0.0
    %131 = vmatpush1.xpose.msra.mxu0 0.0
    %132 = vmatprep.subr.mxu0 0.0
    %133 = vmatpush1.xpose.msra.mxu0 0.0
    %134 = vmatprep.subr.mxu0 0.0
    %135 = vmatpush1.xpose.msra.mxu0 0.0
    %136 = vmatprep.subr.mxu0 0.0
    %137 = vmatpush1.xpose.msra.mxu0 0.0
    %138 = vmatprep.subr.mxu0 0.0
    %139 = vmatpush1.xpose.msra.mxu0 0.0
    %140 = vmatprep.subr.mxu0 0.0
    %141 = vmatpush1.xpose.msra.mxu0 0.0
    %142 = vmatprep.subr.mxu0 0.0
    %143 = vmatpush1.xpose.msra.mxu0 0.0
    %144 = vmatprep.subr.mxu0 0.0
    %145 = vmatpush1.xpose.msra.mxu0 0.0
    %146 = vmatprep.subr.mxu0 0.0
    %147 = vmatpush1.xpose.msra.mxu0 %v114
    %148 = vmatprep.subr.mxu0 0.0
    %149 = vmatpush2.xpose.msra.mxu0 0.0
    %150 = vmatprep.subr.mxu0 0.0
    %151 = vmatpush2.xpose.msra.mxu0 0.0
    %152 = vmatprep.subr.mxu0 0.0
    %153 = vmatpush2.xpose.msra.mxu0 0.0
    %154 = vmatprep.subr.mxu0 0.0
    %155 = vmatpush2.xpose.msra.mxu0 0.0
    %156 = vmatprep.subr.mxu0 0.0
    %157 = vmatpush2.xpose.msra.mxu0 0.0
    %158 = vmatprep.subr.mxu0 0.0
    %159 = vmatpush2.xpose.msra.mxu0 0.0
    %160 = vmatprep.subr.mxu0 0.0
    %161 = vmatpush2.xpose.msra.mxu0 0.0
    %162 = vmatprep.subr.mxu0 0.0
    %163 = vmatpush2.xpose.msra.mxu0 0.0
    %164 = vmatprep.subr.mxu0 0.0
    %165 = vmatpush2.xpose.msra.mxu0 0.0
    %166 = vmatprep.subr.mxu0 0.0
    %167 = vmatpush2.xpose.msra.mxu0 0.0
    %168 = vmatprep.subr.mxu0 0.0
    %169 = vmatpush2.xpose.msra.mxu0 0.0
    %170 = vmatprep.subr.mxu0 0.0
    %171 = vmatpush2.xpose.msra.mxu0 0.0
    %172 = vmatprep.subr.mxu0 0.0
    %173 = vmatpush2.xpose.msra.mxu0 0.0
    %174 = vmatprep.subr.mxu0 0.0
    %175 = vmatpush2.xpose.msra.mxu0 0.0
    %176 = vmatprep.subr.mxu0 0.0
    %177 = vmatpush2.xpose.msra.mxu0 0.0
    %178 = vmatprep.subr.mxu0 0.0
    %179 = vmatpush2.xpose.msra.mxu0 0.0
    %180 = vmatprep.mubr.f32.mxu0 0.0
    %181 = vmatmul.mubr.f32.gmra.mxu0 %v111
    %v182 = vpop.f32.mrf.mxu0
    %v183 = vadd.f32 0.0, %v182
    %v184 = vpop.f32.mrf.mxu0
    %185 = vdwg.mxu0
    %v186 = vld [vmem:[%s4] sm:$0xff]
    %vm187 = vcmask 64512
    %v189 = vsel %vm187, %v183, 0
    %191 = vmatprep.subr.mxu0 0.0
    %192 = vmatpush1.msra.mxu0 0.0
    %193 = vmatprep.subr.mxu0 0.0
    %194 = vmatpush1.msra.mxu0 0.0
    %195 = vmatprep.subr.mxu0 0.0
    %196 = vmatpush1.msra.mxu0 0.0
    %197 = vmatprep.subr.mxu0 0.0
    %198 = vmatpush1.msra.mxu0 0.0
    %199 = vmatprep.subr.mxu0 0.0
    %200 = vmatpush1.msra.mxu0 0.0
    %201 = vmatprep.subr.mxu0 0.0
    %202 = vmatpush1.msra.mxu0 0.0
    %203 = vmatprep.subr.mxu0 0.0
    %204 = vmatpush1.msra.mxu0 0.0
    %205 = vmatprep.subr.mxu0 0.0
    %206 = vmatpush1.msra.mxu0 0.0
    %207 = vmatprep.subr.mxu0 0.0
    %208 = vmatpush1.msra.mxu0 0.0
    %209 = vmatprep.subr.mxu0 0.0
    %210 = vmatpush1.msra.mxu0 0.0
    %211 = vmatprep.subr.mxu0 0.0
    %212 = vmatpush1.msra.mxu0 0.0
    %213 = vmatprep.subr.mxu0 0.0
    %214 = vmatpush1.msra.mxu0 0.0
    %215 = vmatprep.subr.mxu0 0.0
    %216 = vmatpush1.msra.mxu0 0.0
    %217 = vmatprep.subr.mxu0 0.0
    %218 = vmatpush1.msra.mxu0 0.0
    %219 = vmatprep.subr.mxu0 0.0
    %220 = vmatpush1.msra.mxu0 0.0
    %221 = vmatprep.subr.mxu0 0.0
    %222 = vmatpush1.msra.mxu0 %v186
    %223 = vmatprep.subr.mxu0 0.0
    %224 = vmatpush2.msra.mxu0 0.0
    %225 = vmatprep.subr.mxu0 0.0
    %226 = vmatpush2.msra.mxu0 0.0
    %227 = vmatprep.subr.mxu0 0.0
    %228 = vmatpush2.msra.mxu0 0.0
    %229 = vmatprep.subr.mxu0 0.0
    %230 = vmatpush2.msra.mxu0 0.0
    %231 = vmatprep.subr.mxu0 0.0
    %232 = vmatpush2.msra.mxu0 0.0
    %233 = vmatprep.subr.mxu0 0.0
    %234 = vmatpush2.msra.mxu0 0.0
    %235 = vmatprep.subr.mxu0 0.0
    %236 = vmatpush2.msra.mxu0 0.0
    %237 = vmatprep.subr.mxu0 0.0
    %238 = vmatpush2.msra.mxu0 0.0
    %239 = vmatprep.subr.mxu0 0.0
    %240 = vmatpush2.msra.mxu0 0.0
    %241 = vmatprep.subr.mxu0 0.0
    %242 = vmatpush2.msra.mxu0 0.0
    %243 = vmatprep.subr.mxu0 0.0
    %244 = vmatpush2.msra.mxu0 0.0
    %245 = vmatprep.subr.mxu0 0.0
    %246 = vmatpush2.msra.mxu0 0.0
    %247 = vmatprep.subr.mxu0 0.0
    %248 = vmatpush2.msra.mxu0 0.0
    %249 = vmatprep.subr.mxu0 0.0
    %250 = vmatpush2.msra.mxu0 0.0
    %251 = vmatprep.subr.mxu0 0.0
    %252 = vmatpush2.msra.mxu0 0.0
    %253 = vmatprep.subr.mxu0 0.0
    %254 = vmatpush2.msra.mxu0 0.0
    %255 = vmatprep.mubr.f32.mxu0 0.0
    %256 = vmatmul.mubr.f32.gmra.mxu0 %v189
    %v257 = vpop.f32.mrf.mxu0
    %v258 = vadd.f32 0.0, %v257
    %v259 = vpop.f32.mrf.mxu0
    %260 = vdwg.mxu0
    %v261 = vmax.f32 %v183, %v258
    %s262 = scalar_lea.vmem %s4, 8
    %v263 = vld [vmem:[%s262] sm:$0xff]
    %v265 = vsel %vm187, %v261, 0
    %267 = vmatprep.subr.mxu0 0.0
    %268 = vmatpush1.msra.mxu0 0.0
    %269 = vmatprep.subr.mxu0 0.0
    %270 = vmatpush1.msra.mxu0 0.0
    %271 = vmatprep.subr.mxu0 0.0
    %272 = vmatpush1.msra.mxu0 0.0
    %273 = vmatprep.subr.mxu0 0.0
    %274 = vmatpush1.msra.mxu0 0.0
    %275 = vmatprep.subr.mxu0 0.0
    %276 = vmatpush1.msra.mxu0 0.0
    %277 = vmatprep.subr.mxu0 0.0
    %278 = vmatpush1.msra.mxu0 0.0
    %279 = vmatprep.subr.mxu0 0.0
    %280 = vmatpush1.msra.mxu0 0.0
    %281 = vmatprep.subr.mxu0 0.0
    %282 = vmatpush1.msra.mxu0 0.0
    %283 = vmatprep.subr.mxu0 0.0
    %284 = vmatpush1.msra.mxu0 0.0
    %285 = vmatprep.subr.mxu0 0.0
    %286 = vmatpush1.msra.mxu0 0.0
    %287 = vmatprep.subr.mxu0 0.0
    %288 = vmatpush1.msra.mxu0 0.0
    %289 = vmatprep.subr.mxu0 0.0
    %290 = vmatpush1.msra.mxu0 0.0
    %291 = vmatprep.subr.mxu0 0.0
    %292 = vmatpush1.msra.mxu0 0.0
    %293 = vmatprep.subr.mxu0 0.0
    %294 = vmatpush1.msra.mxu0 0.0
    %295 = vmatprep.subr.mxu0 0.0
    %296 = vmatpush1.msra.mxu0 0.0
    %297 = vmatprep.subr.mxu0 0.0
    %298 = vmatpush1.msra.mxu0 %v263
    %299 = vmatprep.subr.mxu0 0.0
    %300 = vmatpush2.msra.mxu0 0.0
    %301 = vmatprep.subr.mxu0 0.0
    %302 = vmatpush2.msra.mxu0 0.0
    %303 = vmatprep.subr.mxu0 0.0
    %304 = vmatpush2.msra.mxu0 0.0
    %305 = vmatprep.subr.mxu0 0.0
    %306 = vmatpush2.msra.mxu0 0.0
    %307 = vmatprep.subr.mxu0 0.0
    %308 = vmatpush2.msra.mxu0 0.0
    %309 = vmatprep.subr.mxu0 0.0
    %310 = vmatpush2.msra.mxu0 0.0
    %311 = vmatprep.subr.mxu0 0.0
    %312 = vmatpush2.msra.mxu0 0.0
    %313 = vmatprep.subr.mxu0 0.0
    %314 = vmatpush2.msra.mxu0 0.0
    %315 = vmatprep.subr.mxu0 0.0
    %316 = vmatpush2.msra.mxu0 0.0
    %317 = vmatprep.subr.mxu0 0.0
    %318 = vmatpush2.msra.mxu0 0.0
    %319 = vmatprep.subr.mxu0 0.0
    %320 = vmatpush2.msra.mxu0 0.0
    %321 = vmatprep.subr.mxu0 0.0
    %322 = vmatpush2.msra.mxu0 0.0
    %323 = vmatprep.subr.mxu0 0.0
    %324 = vmatpush2.msra.mxu0 0.0
    %325 = vmatprep.subr.mxu0 0.0
    %326 = vmatpush2.msra.mxu0 0.0
    %327 = vmatprep.subr.mxu0 0.0
    %328 = vmatpush2.msra.mxu0 0.0
    %329 = vmatprep.subr.mxu0 0.0
    %330 = vmatpush2.msra.mxu0 0.0
    %331 = vmatprep.mubr.f32.mxu0 0.0
    %332 = vmatmul.mubr.f32.gmra.mxu0 %v265
    %v333 = vpop.f32.mrf.mxu0
    %v334 = vadd.f32 0.0, %v333
    %v335 = vpop.f32.mrf.mxu0
    %336 = vdwg.mxu0
    %v337 = vmax.f32 %v261, %v334
    %s338 = scalar_lea.vmem %s4, 16
    %v339 = vld [vmem:[%s338] sm:$0xff]
    %v341 = vsel %vm187, %v337, 0
    %343 = vmatprep.subr.mxu0 0.0
    %344 = vmatpush1.msra.mxu0 0.0
    %345 = vmatprep.subr.mxu0 0.0
    %346 = vmatpush1.msra.mxu0 0.0
    %347 = vmatprep.subr.mxu0 0.0
    %348 = vmatpush1.msra.mxu0 0.0
    %349 = vmatprep.subr.mxu0 0.0
    %350 = vmatpush1.msra.mxu0 0.0
    %351 = vmatprep.subr.mxu0 0.0
    %352 = vmatpush1.msra.mxu0 0.0
    %353 = vmatprep.subr.mxu0 0.0
    %354 = vmatpush1.msra.mxu0 0.0
    %355 = vmatprep.subr.mxu0 0.0
    %356 = vmatpush1.msra.mxu0 0.0
    %357 = vmatprep.subr.mxu0 0.0
    %358 = vmatpush1.msra.mxu0 0.0
    %359 = vmatprep.subr.mxu0 0.0
    %360 = vmatpush1.msra.mxu0 0.0
    %361 = vmatprep.subr.mxu0 0.0
    %362 = vmatpush1.msra.mxu0 0.0
    %363 = vmatprep.subr.mxu0 0.0
    %364 = vmatpush1.msra.mxu0 0.0
    %365 = vmatprep.subr.mxu0 0.0
    %366 = vmatpush1.msra.mxu0 0.0
    %367 = vmatprep.subr.mxu0 0.0
    %368 = vmatpush1.msra.mxu0 0.0
    %369 = vmatprep.subr.mxu0 0.0
    %370 = vmatpush1.msra.mxu0 0.0
    %371 = vmatprep.subr.mxu0 0.0
    %372 = vmatpush1.msra.mxu0 0.0
    %373 = vmatprep.subr.mxu0 0.0
    %374 = vmatpush1.msra.mxu0 %v339
    %375 = vmatprep.subr.mxu0 0.0
    %376 = vmatpush2.msra.mxu0 0.0
    %377 = vmatprep.subr.mxu0 0.0
    %378 = vmatpush2.msra.mxu0 0.0
    %379 = vmatprep.subr.mxu0 0.0
    %380 = vmatpush2.msra.mxu0 0.0
    %381 = vmatprep.subr.mxu0 0.0
    %382 = vmatpush2.msra.mxu0 0.0
    %383 = vmatprep.subr.mxu0 0.0
    %384 = vmatpush2.msra.mxu0 0.0
    %385 = vmatprep.subr.mxu0 0.0
    %386 = vmatpush2.msra.mxu0 0.0
    %387 = vmatprep.subr.mxu0 0.0
    %388 = vmatpush2.msra.mxu0 0.0
    %389 = vmatprep.subr.mxu0 0.0
    %390 = vmatpush2.msra.mxu0 0.0
    %391 = vmatprep.subr.mxu0 0.0
    %392 = vmatpush2.msra.mxu0 0.0
    %393 = vmatprep.subr.mxu0 0.0
    %394 = vmatpush2.msra.mxu0 0.0
    %395 = vmatprep.subr.mxu0 0.0
    %396 = vmatpush2.msra.mxu0 0.0
    %397 = vmatprep.subr.mxu0 0.0
    %398 = vmatpush2.msra.mxu0 0.0
    %399 = vmatprep.subr.mxu0 0.0
    %400 = vmatpush2.msra.mxu0 0.0
    %401 = vmatprep.subr.mxu0 0.0
    %402 = vmatpush2.msra.mxu0 0.0
    %403 = vmatprep.subr.mxu0 0.0
    %404 = vmatpush2.msra.mxu0 0.0
    %405 = vmatprep.subr.mxu0 0.0
    %406 = vmatpush2.msra.mxu0 0.0
    %407 = vmatprep.mubr.f32.mxu0 0.0
    %408 = vmatmul.mubr.f32.gmra.mxu0 %v341
    %v409 = vpop.f32.mrf.mxu0
    %v410 = vadd.f32 0.0, %v409
    %v411 = vpop.f32.mrf.mxu0
    %412 = vdwg.mxu0
    %v413 = vmax.f32 %v337, %v410
    %s414 = scalar_lea.vmem %s4, 24
    %v415 = vld [vmem:[%s414] sm:$0xff]
    %v417 = vsel %vm187, %v413, 0
    %419 = vmatprep.subr.mxu0 0.0
    %420 = vmatpush1.msra.mxu0 0.0
    %421 = vmatprep.subr.mxu0 0.0
    %422 = vmatpush1.msra.mxu0 0.0
    %423 = vmatprep.subr.mxu0 0.0
    %424 = vmatpush1.msra.mxu0 0.0
    %425 = vmatprep.subr.mxu0 0.0
    %426 = vmatpush1.msra.mxu0 0.0
    %427 = vmatprep.subr.mxu0 0.0
    %428 = vmatpush1.msra.mxu0 0.0
    %429 = vmatprep.subr.mxu0 0.0
    %430 = vmatpush1.msra.mxu0 0.0
    %431 = vmatprep.subr.mxu0 0.0
    %432 = vmatpush1.msra.mxu0 0.0
    %433 = vmatprep.subr.mxu0 0.0
    %434 = vmatpush1.msra.mxu0 0.0
    %435 = vmatprep.subr.mxu0 0.0
    %436 = vmatpush1.msra.mxu0 0.0
    %437 = vmatprep.subr.mxu0 0.0
    %438 = vmatpush1.msra.mxu0 0.0
    %439 = vmatprep.subr.mxu0 0.0
    %440 = vmatpush1.msra.mxu0 0.0
    %441 = vmatprep.subr.mxu0 0.0
    %442 = vmatpush1.msra.mxu0 0.0
    %443 = vmatprep.subr.mxu0 0.0
    %444 = vmatpush1.msra.mxu0 0.0
    %445 = vmatprep.subr.mxu0 0.0
    %446 = vmatpush1.msra.mxu0 0.0
    %447 = vmatprep.subr.mxu0 0.0
    %448 = vmatpush1.msra.mxu0 0.0
    %449 = vmatprep.subr.mxu0 0.0
    %450 = vmatpush1.msra.mxu0 %v415
    %451 = vmatprep.subr.mxu0 0.0
    %452 = vmatpush2.msra.mxu0 0.0
    %453 = vmatprep.subr.mxu0 0.0
    %454 = vmatpush2.msra.mxu0 0.0
    %455 = vmatprep.subr.mxu0 0.0
    %456 = vmatpush2.msra.mxu0 0.0
    %457 = vmatprep.subr.mxu0 0.0
    %458 = vmatpush2.msra.mxu0 0.0
    %459 = vmatprep.subr.mxu0 0.0
    %460 = vmatpush2.msra.mxu0 0.0
    %461 = vmatprep.subr.mxu0 0.0
    %462 = vmatpush2.msra.mxu0 0.0
    %463 = vmatprep.subr.mxu0 0.0
    %464 = vmatpush2.msra.mxu0 0.0
    %465 = vmatprep.subr.mxu0 0.0
    %466 = vmatpush2.msra.mxu0 0.0
    %467 = vmatprep.subr.mxu0 0.0
    %468 = vmatpush2.msra.mxu0 0.0
    %469 = vmatprep.subr.mxu0 0.0
    %470 = vmatpush2.msra.mxu0 0.0
    %471 = vmatprep.subr.mxu0 0.0
    %472 = vmatpush2.msra.mxu0 0.0
    %473 = vmatprep.subr.mxu0 0.0
    %474 = vmatpush2.msra.mxu0 0.0
    %475 = vmatprep.subr.mxu0 0.0
    %476 = vmatpush2.msra.mxu0 0.0
    %477 = vmatprep.subr.mxu0 0.0
    %478 = vmatpush2.msra.mxu0 0.0
    %479 = vmatprep.subr.mxu0 0.0
    %480 = vmatpush2.msra.mxu0 0.0
    %481 = vmatprep.subr.mxu0 0.0
    %482 = vmatpush2.msra.mxu0 0.0
    %483 = vmatprep.mubr.f32.mxu0 0.0
    %484 = vmatmul.mubr.f32.gmra.mxu0 %v417
    %v485 = vpop.f32.mrf.mxu0
    %v486 = vadd.f32 0.0, %v485
    %v487 = vpop.f32.mrf.mxu0
    %488 = vdwg.mxu0
    %v489 = vsub.f32 %v183, %v486
    %v490 = vmul.f32 %v489, 1.442695
    %v491 = vpow.pop %v490
    %s492 = scalar_lea.vmem %s4, 32
    %v493 = vld [vmem:[%s492] sm:$0xff]
    %v495 = vsel %vm187, %v491, 0
    %497 = vmatprep.subr.mxu0 0.0
    %498 = vmatpush1.msra.mxu0 0.0
    %499 = vmatprep.subr.mxu0 0.0
    %500 = vmatpush1.msra.mxu0 0.0
    %501 = vmatprep.subr.mxu0 0.0
    %502 = vmatpush1.msra.mxu0 0.0
    %503 = vmatprep.subr.mxu0 0.0
    %504 = vmatpush1.msra.mxu0 0.0
    %505 = vmatprep.subr.mxu0 0.0
    %506 = vmatpush1.msra.mxu0 0.0
    %507 = vmatprep.subr.mxu0 0.0
    %508 = vmatpush1.msra.mxu0 0.0
    %509 = vmatprep.subr.mxu0 0.0
    %510 = vmatpush1.msra.mxu0 0.0
    %511 = vmatprep.subr.mxu0 0.0
    %512 = vmatpush1.msra.mxu0 0.0
    %513 = vmatprep.subr.mxu0 0.0
    %514 = vmatpush1.msra.mxu0 0.0
    %515 = vmatprep.subr.mxu0 0.0
    %516 = vmatpush1.msra.mxu0 0.0
    %517 = vmatprep.subr.mxu0 0.0
    %518 = vmatpush1.msra.mxu0 0.0
    %519 = vmatprep.subr.mxu0 0.0
    %520 = vmatpush1.msra.mxu0 0.0
    %521 = vmatprep.subr.mxu0 0.0
    %522 = vmatpush1.msra.mxu0 0.0
    %523 = vmatprep.subr.mxu0 0.0
    %524 = vmatpush1.msra.mxu0 0.0
    %525 = vmatprep.subr.mxu0 0.0
    %526 = vmatpush1.msra.mxu0 0.0
    %527 = vmatprep.subr.mxu0 0.0
    %528 = vmatpush1.msra.mxu0 %v493
    %529 = vmatprep.subr.mxu0 0.0
    %530 = vmatpush2.msra.mxu0 0.0
    %531 = vmatprep.subr.mxu0 0.0
    %532 = vmatpush2.msra.mxu0 0.0
    %533 = vmatprep.subr.mxu0 0.0
    %534 = vmatpush2.msra.mxu0 0.0
    %535 = vmatprep.subr.mxu0 0.0
    %536 = vmatpush2.msra.mxu0 0.0
    %537 = vmatprep.subr.mxu0 0.0
    %538 = vmatpush2.msra.mxu0 0.0
    %539 = vmatprep.subr.mxu0 0.0
    %540 = vmatpush2.msra.mxu0 0.0
    %541 = vmatprep.subr.mxu0 0.0
    %542 = vmatpush2.msra.mxu0 0.0
    %543 = vmatprep.subr.mxu0 0.0
    %544 = vmatpush2.msra.mxu0 0.0
    %545 = vmatprep.subr.mxu0 0.0
    %546 = vmatpush2.msra.mxu0 0.0
    %547 = vmatprep.subr.mxu0 0.0
    %548 = vmatpush2.msra.mxu0 0.0
    %549 = vmatprep.subr.mxu0 0.0
    %550 = vmatpush2.msra.mxu0 0.0
    %551 = vmatprep.subr.mxu0 0.0
    %552 = vmatpush2.msra.mxu0 0.0
    %553 = vmatprep.subr.mxu0 0.0
    %554 = vmatpush2.msra.mxu0 0.0
    %555 = vmatprep.subr.mxu0 0.0
    %556 = vmatpush2.msra.mxu0 0.0
    %557 = vmatprep.subr.mxu0 0.0
    %558 = vmatpush2.msra.mxu0 0.0
    %559 = vmatprep.subr.mxu0 0.0
    %560 = vmatpush2.msra.mxu0 0.0
    %561 = vmatprep.mubr.f32.mxu0 0.0
    %562 = vmatmul.mubr.f32.gmra.mxu0 %v495
    %v563 = vpop.f32.mrf.mxu0
    %v564 = vadd.f32 0.0, %v563
    %v565 = vpop.f32.mrf.mxu0
    %566 = vdwg.mxu0
    %v567 = vrcp.pop %v564
    %v568 = vmul.f32 %v491, %v567
    %vm569 = vcmask 57344
    %570 = vst.msk [vmem:[#allocation2] sm:$0x1] %vm569, %v568
    // Predicated region
    $region22: #{tpu_custom_call.1} parent=1 // pred_check
      _
    $region23: #{tpu_custom_call.1} parent=1 // pred_check_branch
      %572 = sbr.rel (0) target = $region25
    $region24: #{tpu_custom_call.1} parent=1 // pred_region
      %s574 = ssub.s32 16, 16
      %575 = vsyncadd [#allocation3], %s574
      %s577 = sshll.u32 [#allocation2], 4
      %s578 = int_to_ptr.vmem [resolvable:$true] %s577
      %580 = dma.vmem_to_hbm [thread:$0]  %s578, 16, %s5, [#allocation3]
    $region25: #{tpu_custom_call.1} parent=1 // pred_fallthru
      _
    // Predicated region
    $region26: #{tpu_custom_call.1} parent=1 // pred_check
      _
    $region27: #{tpu_custom_call.1} parent=1 // pred_check_branch
      %582 = sbr.rel (0) target = $region29
    $region28: #{tpu_custom_call.1} parent=1 // pred_region
      %583 = dma.done [#allocation3], 16
    $region29: #{tpu_custom_call.1} parent=1 // pred_fallthru
      _
    %584 = vsyncpa [#allocation3], 1

</llo_original>
